<compile_context>
chip_gen: v5e
topology: v5e:2x2
jax: 0.10.0
libtpu: 0.0.40
codegen_flags: <defaults>
</compile_context>

<pallas_src>
import functools
import math

import jax
import jax.numpy as jnp
from jax.experimental import pallas as pl
from jax.experimental.pallas import tpu as pltpu


def _round_up(x, m):
    return (x + m - 1) // m * m


def _cdiv(a, b):
    return -(-a // b)


def _vmem_capacity_bytes():
    """Physical VMEM of the current TPU; conservative fallback if unknown."""
    try:
        cap = getattr(pltpu.get_tpu_info(), "vmem_capacity_bytes", None)
        if cap:
            return int(cap)
    except Exception:
        pass
    return 64 * 1024 * 1024  # v7x per-core VMEM (smallest of the generations)


# --------------------------------------------------------------------------
# Kernels
# --------------------------------------------------------------------------
def _router_kernel_mxu(y_ref, s_ref, e_ref, r_ref, w_ref, b_ref, o_ref):
    """Packed lane-dense path; every reduction on the MXU (f32 accumulation).

    y_ref: [tp, r*H*d]   r logical rows flattened per physical row
    s_ref: [r*H*d, r*H]  d-sum selection matrix (0/1)
    e_ref: [r*H, r*H*d]  gate-expansion matrix (= S^T)
    r_ref: [r*H*d, r*d]  head-sum selection into packed output columns (0/1)
    w_ref: [r*H, r*H]    block-diagonal Linear weight (W^T blocks), f32
    b_ref: [1, r*H]      bias tiled r times, f32
    o_ref: [tp, r*d]
    """
    y = y_ref[...]
    # d-reduction (per head) on the MXU, accumulated in f32.
    summary = jnp.dot(y, s_ref[...], preferred_element_type=jnp.float32)
    logits = jnp.dot(summary, w_ref[...], preferred_element_type=jnp.float32)
    gates = jax.nn.sigmoid(logits + b_ref[...])                 # EUP
    # Expand gates back onto the flattened (head, d) lanes.
    gexp = jnp.dot(gates, e_ref[...], preferred_element_type=jnp.float32)
    # Re-read y (cheap VMEM load) instead of keeping the big tile live.
    z = y_ref[...] * gexp.astype(y_ref.dtype)
    # H-reduction on the MXU, f32 accumulation; lands lane-dense in o_ref.
    out = jnp.dot(z, r_ref[...], preferred_element_type=jnp.float32)
    o_ref[...] = out.astype(o_ref.dtype)


def _router_kernel_ew(y_ref, s_ref, w_ref, b_ref, o_ref, *, H, d):
    """d % 128 == 0 path: lane-aligned slices, H-reduction in f32 on the VPU.

    y_ref: [tp, H*d], s_ref: [H*d, H], w_ref: [H, H] (W^T), b_ref: [1, H],
    o_ref: [tp, d].
    """
    y = y_ref[...]
    summary = jnp.dot(y, s_ref[...], preferred_element_type=jnp.float32)
    logits = jnp.dot(summary, w_ref[...], preferred_element_type=jnp.float32)
    gates = jax.nn.sigmoid(logits + b_ref[...])                 # [tp, H] f32
    acc = jnp.zeros((y_ref.shape[0], d), jnp.float32)
    for h in range(H):                      # static unroll, vreg-aligned slices
        g_h = gates[:, h:h + 1].astype(y_ref.dtype)
        acc = acc + (g_h * y_ref[:, h * d:(h + 1) * d]).astype(jnp.float32)
    o_ref[...] = acc.astype(o_ref.dtype)


# --------------------------------------------------------------------------
# Wrapper
# --------------------------------------------------------------------------
def dendritic_router(y_heads, weight, bias, *, row_tile=None):
    """y_heads: [B, L, H, d]; weight: [H, H]; bias: [H] -> [B, L, d].

    row_tile (optional): approximate number of *logical* rows per grid step,
    for sweeping; default sizes the tile from the per-generation VMEM budget.
    """
    B, L, H, d = y_heads.shape
    N = B * L
    in_dt = jnp.dtype(y_heads.dtype)
    out_dt = in_dt
    itemsize = in_dt.itemsize
    sub = 8 * max(1, 4 // itemsize)            # sublanes: 8 f32, 16 bf16, 32 i8

    # ---- row packing factor r: make both last dims multiples of 128 --------
    if d % 128 == 0:
        r, mode = 1, "ew"
    else:
        r = 128 // math.gcd(d, 128)
        if r > 128 or r * H * d * itemsize > (4 << 20):
            r = 1                               # pathological d: accept masked stores
        mode = "mxu"
    rHd, rH, rd = r * H * d, r * H, r * d

    # ---- per-generation VMEM budget ----------------------------------------
    cap = _vmem_capacity_bytes()
    if cap >= 100 * (1 << 20):                  # v5e / v6e: 128 MiB physical
        tile_budget, vmem_limit = 40 << 20, 96 << 20
    else:                                       # v7x (64 MiB) or unknown
        tile_budget, vmem_limit = 28 << 20, 48 << 20

    # Resident (constant-index-map) operand footprint estimate (x2 for safety).
    if mode == "mxu":
        resident = (_round_up(rHd, sub) * _round_up(rH, 128) * itemsize
                    + _round_up(rH, sub) * _round_up(rHd, 128) * itemsize
                    + _round_up(rHd, sub) * _round_up(rd, 128) * itemsize
                    + _round_up(rH, 8) * _round_up(rH, 128) * 4
                    + 8 * _round_up(rH, 128) * 4)
    else:
        resident = (_round_up(H * d, sub) * 128 * itemsize + 8 * 128 * 4
                    + 8 * 128 * 4)
    per_row = 2 * (_round_up(rHd, 128) + _round_up(rd, 128)) * itemsize  # dbl-buf
    budget = max(tile_budget - 2 * resident - (1 << 20), 1 << 20)

    # ---- tile / grid selection (balanced tail, >= 2 steps when possible) ---
    P = _cdiv(N, r)                             # physical (packed) rows
    if row_tile is not None:
        tp_cap = max(sub, _round_up(_cdiv(int(row_tile), r), sub))
    else:
        tp_cap = max(sub, (budget // per_row) // sub * sub)
    steps = _cdiv(P, tp_cap)
    if steps == 1 and P > sub:
        steps = 2                               # give both v7x TCs a DMA stream
    tp = _round_up(_cdiv(P, steps), sub)
    steps = _cdiv(P, tp)
    Pp = steps * tp
    Np_log = Pp * r

    # ---- wrapper-side layout plumbing (reshapes are free; pad only the tail)
    y_flat = y_heads.reshape(N, H * d)
    if Np_log != N:
        y_flat = jnp.pad(y_flat, ((0, Np_log - N), (0, 0)))   # zero rows -> zero out
    y_pack = y_flat.reshape(Pp, rHd)

    w_t = weight.astype(jnp.float32).T

    if mode == "mxu":
        eye_rH = jnp.eye(rH, dtype=jnp.float32)
        s_mat = jnp.kron(eye_rH, jnp.ones((d, 1), jnp.float32))        # [rHd, rH]
        e_mat = jnp.kron(eye_rH, jnp.ones((1, d), jnp.float32))        # [rH, rHd]
        r_mat = jnp.kron(jnp.eye(r, dtype=jnp.float32),
                         jnp.kron(jnp.ones((H, 1), jnp.float32),
                                  jnp.eye(d, dtype=jnp.float32)))      # [rHd, rd]
        w_bd = jnp.kron(jnp.eye(r, dtype=jnp.float32), w_t)            # [rH, rH]
        b_bd = jnp.tile(bias.astype(jnp.float32), r).reshape(1, rH)
        operands = (y_pack, s_mat.astype(in_dt), e_mat.astype(in_dt),
                    r_mat.astype(in_dt), w_bd, b_bd)
        in_specs = [
            pl.BlockSpec((tp, rHd), lambda i: (i, 0)),
            pl.BlockSpec((rHd, rH), lambda i: (0, 0)),   # resident
            pl.BlockSpec((rH, rHd), lambda i: (0, 0)),   # resident
            pl.BlockSpec((rHd, rd), lambda i: (0, 0)),   # resident
            pl.BlockSpec((rH, rH), lambda i: (0, 0)),    # resident
            pl.BlockSpec((1, rH), lambda i: (0, 0)),     # resident
        ]
        kernel = _router_kernel_mxu
        flops_row = 2 * rHd * (2 * rH + rd) + 2 * rH * rH + rHd
        trans_row = rH
    else:
        s_mat = jnp.kron(jnp.eye(H, dtype=jnp.float32),
                         jnp.ones((d, 1), jnp.float32))                # [Hd, H]
        b_2d = bias.astype(jnp.float32).reshape(1, H)
        operands = (y_pack, s_mat.astype(in_dt), w_t, b_2d)
        in_specs = [
            pl.BlockSpec((tp, H * d), lambda i: (i, 0)),
            pl.BlockSpec((H * d, H), lambda i: (0, 0)),  # resident
            pl.BlockSpec((H, H), lambda i: (0, 0)),      # resident
            pl.BlockSpec((1, H), lambda i: (0, 0)),      # resident
        ]
        kernel = functools.partial(_router_kernel_ew, H=H, d=d)
        flops_row = 2 * H * d * H + 2 * H * H + 3 * H * d
        trans_row = H

    resident_bytes = sum(int(o.size) * jnp.dtype(o.dtype).itemsize
                         for o in operands[1:])
    cost = pl.CostEstimate(
        flops=int(Pp * flops_row),
        transcendentals=int(Pp * trans_row),
        bytes_accessed=int(Pp * (rHd + rd) * itemsize + resident_bytes))

    out_pack = pl.pallas_call(
        kernel,
        out_shape=jax.ShapeDtypeStruct((Pp, rd), out_dt),
        grid_spec=pltpu.PrefetchScalarGridSpec(
            num_scalar_prefetch=0,
            grid=(steps,),
            in_specs=in_specs,
            out_specs=pl.BlockSpec((tp, rd), lambda i: (i, 0)),
        ),
        compiler_params=pltpu.CompilerParams(
            dimension_semantics=("parallel",),        # megacore on v7x
            vmem_limit_bytes=int(vmem_limit),
        ),
        cost_estimate=cost,
    )(*operands)

    return out_pack.reshape(Np_log, d)[:N].reshape(B, L, d)


# --------------------------------------------------------------------------
# Reference & self-test
# --------------------------------------------------------------------------
def _reference(y_heads, weight, bias):
    y = y_heads.astype(jnp.float32)
    summary = jnp.sum(y, axis=-1)
    gates = jax.nn.sigmoid(summary @ weight.astype(jnp.float32).T
                           + bias.astype(jnp.float32))
    return jnp.sum(gates[..., None] * y, axis=2)


if __name__ == "__main__":
    key = jax.random.PRNGKey(0)
    k_y, k_w, k_b, k_y2, k_y3 = jax.random.split(key, 5)

    B, L, H, d = 2, 8, 4, 32
    y = jax.random.normal(k_y, (B, L, H, d), dtype=jnp.float32)
    bound = 1.0 / jnp.sqrt(jnp.float32(H))
    weight = jax.random.uniform(k_w, (H, H), jnp.float32, -bound, bound)
    bias = jax.random.uniform(k_b, (H,), jnp.float32, -bound, bound)

    # 1) main config (d < 128 -> packed, lane-dense, MXU path)
    out = jax.block_until_ready(dendritic_router(y, weight, bias))
    ref = _reference(y, weight, bias)
    assert out.shape == (B, L, d)
    assert jnp.allclose(out, ref, atol=1e-5, rtol=1e-5)

    # 2) ragged N + multi-step grid (tail balancing / padding path)
    B2, L2 = 3, 50
    y2 = jax.random.normal(k_y2, (B2, L2, H, d), dtype=jnp.float32)
    out2 = jax.block_until_ready(dendritic_router(y2, weight, bias, row_tile=64))
    ref2 = _reference(y2, weight, bias)
    assert out2.shape == (B2, L2, d)
    assert jnp.allclose(out2, ref2, atol=1e-5, rtol=1e-5)

    # 3) bf16 input: d- and H-reductions accumulate in f32 on the MXU
    y_bf = y.astype(jnp.bfloat16)
    out_bf = jax.block_until_ready(dendritic_router(y_bf, weight, bias))
    ref_bf = _reference(y_bf, weight, bias)
    assert jnp.allclose(out_bf.astype(jnp.float32), ref_bf, atol=1.5e-1, rtol=5e-2)

    # 4) d multiple of 128 -> elementwise lane-aligned path (no packing needed)
    d3 = 128
    y3 = jax.random.normal(k_y3, (B, L, H, d3), dtype=jnp.float32)
    out3 = jax.block_until_ready(dendritic_router(y3, weight, bias))
    ref3 = _reference(y3, weight, bias)
    assert out3.shape == (B, L, d3)
    assert jnp.allclose(out3, ref3, atol=1e-5, rtol=1e-5)

    print("KERNEL_OK")
</pallas_src>

<mosaic_0001>
module attributes {stable_mosaic.version = 11 : i64} {
  func.func @_router_kernel_mxu(%arg0: i32, %arg1: memref<8x512xf32, #tpu.memory_space<vmem>>, %arg2: memref<512x16xf32, #tpu.memory_space<vmem>>, %arg3: memref<16x512xf32, #tpu.memory_space<vmem>>, %arg4: memref<512x128xf32, #tpu.memory_space<vmem>>, %arg5: memref<16x16xf32, #tpu.memory_space<vmem>>, %arg6: memref<1x16xf32, #tpu.memory_space<vmem>>, %arg7: memref<8x128xf32, #tpu.memory_space<vmem>>) attributes {dimension_semantics = [#tpu.dimension_semantics<parallel>], iteration_bounds = array<i64: 1>, scalar_prefetch = 0 : i64, scratch_operands = 0 : i64, tpu.core_type = #tpu.core_type<tc>, window_params = [{transform_indices = @transform_0, window_bounds = array<i64: 8, 512>}, {pipeline_mode = #tpu.pipeline_mode<synchronous>, transform_indices = @transform_1, window_bounds = array<i64: 512, 16>}, {pipeline_mode = #tpu.pipeline_mode<synchronous>, transform_indices = @transform_2, window_bounds = array<i64: 16, 512>}, {pipeline_mode = #tpu.pipeline_mode<synchronous>, transform_indices = @transform_3, window_bounds = array<i64: 512, 128>}, {pipeline_mode = #tpu.pipeline_mode<synchronous>, transform_indices = @transform_4, window_bounds = array<i64: 16, 16>}, {pipeline_mode = #tpu.pipeline_mode<synchronous>, transform_indices = @transform_5, window_bounds = array<i64: 1, 16>}, {transform_indices = @transform_6, window_bounds = array<i64: 8, 128>}]} {
    %c0 = arith.constant 0 : index
    %c0_0 = arith.constant 0 : index
    %0 = vector.load %arg1[%c0, %c0_0] : memref<8x512xf32, #tpu.memory_space<vmem>>, vector<8x512xf32>
    %c0_1 = arith.constant 0 : index
    %c0_2 = arith.constant 0 : index
    %1 = vector.load %arg2[%c0_1, %c0_2] : memref<512x16xf32, #tpu.memory_space<vmem>>, vector<512x16xf32>
    %cst = arith.constant dense<0.000000e+00> : vector<8x16xf32>
    %2 = tpu.matmul %0, %1, %cst {dimension_numbers = #tpu.dot_dimension_numbers<[1], [0], [0], [1], [0, 0, 1, 1], [], []>} : vector<8x512xf32>, vector<512x16xf32>, vector<8x16xf32> -> vector<8x16xf32>
    %c0_3 = arith.constant 0 : index
    %c0_4 = arith.constant 0 : index
    %3 = vector.load %arg5[%c0_3, %c0_4] : memref<16x16xf32, #tpu.memory_space<vmem>>, vector<16x16xf32>
    %cst_5 = arith.constant dense<0.000000e+00> : vector<8x16xf32>
    %4 = tpu.matmul %2, %3, %cst_5 {dimension_numbers = #tpu.dot_dimension_numbers<[1], [0], [0], [1], [0, 0, 1, 1], [], []>} : vector<8x16xf32>, vector<16x16xf32>, vector<8x16xf32> -> vector<8x16xf32>
    %c0_6 = arith.constant 0 : index
    %c0_7 = arith.constant 0 : index
    %5 = vector.load %arg6[%c0_6, %c0_7] : memref<1x16xf32, #tpu.memory_space<vmem>>, vector<1x16xf32>
    %6 = vector.broadcast %5 : vector<1x16xf32> to vector<8x16xf32>
    %7 = arith.addf %4, %6 : vector<8x16xf32>
    %8 = arith.negf %7 : vector<8x16xf32>
    %9 = math.exp %8 : vector<8x16xf32>
    %cst_8 = arith.constant 1.000000e+00 : f32
    %10 = vector.broadcast %cst_8 : f32 to vector<8x16xf32>
    %11 = arith.addf %10, %9 : vector<8x16xf32>
    %12 = arith.divf %10, %11 : vector<8x16xf32>
    %c0_9 = arith.constant 0 : index
    %c0_10 = arith.constant 0 : index
    %13 = vector.load %arg3[%c0_9, %c0_10] : memref<16x512xf32, #tpu.memory_space<vmem>>, vector<16x512xf32>
    %cst_11 = arith.constant dense<0.000000e+00> : vector<8x512xf32>
    %14 = tpu.matmul %12, %13, %cst_11 {dimension_numbers = #tpu.dot_dimension_numbers<[1], [0], [0], [1], [0, 0, 1, 1], [], []>} : vector<8x16xf32>, vector<16x512xf32>, vector<8x512xf32> -> vector<8x512xf32>
    %c0_12 = arith.constant 0 : index
    %c0_13 = arith.constant 0 : index
    %15 = vector.load %arg1[%c0_12, %c0_13] : memref<8x512xf32, #tpu.memory_space<vmem>>, vector<8x512xf32>
    %16 = arith.mulf %15, %14 : vector<8x512xf32>
    %c0_14 = arith.constant 0 : index
    %c0_15 = arith.constant 0 : index
    %17 = vector.load %arg4[%c0_14, %c0_15] : memref<512x128xf32, #tpu.memory_space<vmem>>, vector<512x128xf32>
    %cst_16 = arith.constant dense<0.000000e+00> : vector<8x128xf32>
    %18 = tpu.matmul %16, %17, %cst_16 {dimension_numbers = #tpu.dot_dimension_numbers<[1], [0], [0], [1], [0, 0, 1, 1], [], []>} : vector<8x512xf32>, vector<512x128xf32>, vector<8x128xf32> -> vector<8x128xf32>
    %c0_17 = arith.constant 0 : index
    %c0_18 = arith.constant 0 : index
    %19 = vector.load %arg7[%c0_17, %c0_18] : memref<8x128xf32, #tpu.memory_space<vmem>>, vector<8x128xf32>
    tpu.vector_store %arg7[%c0_17, %c0_18], %18 {strides = array<i32>} : memref<8x128xf32, #tpu.memory_space<vmem>>, vector<8x128xf32>,
    return
  }
  func.func @transform_0(%arg0: i32) -> (i32, i32) {
    %c0_i32 = arith.constant 0 : i32
    %c0_i32_0 = arith.constant 0 : i32
    return %arg0, %c0_i32 : i32, i32
  }
  func.func @transform_1(%arg0: i32) -> (i32, i32) {
    %c0_i32 = arith.constant 0 : i32
    %c0_i32_0 = arith.constant 0 : i32
    %c0_i32_1 = arith.constant 0 : i32
    return %c0_i32, %c0_i32_0 : i32, i32
  }
  func.func @transform_2(%arg0: i32) -> (i32, i32) {
    %c0_i32 = arith.constant 0 : i32
    %c0_i32_0 = arith.constant 0 : i32
    %c0_i32_1 = arith.constant 0 : i32
    return %c0_i32, %c0_i32_0 : i32, i32
  }
  func.func @transform_3(%arg0: i32) -> (i32, i32) {
    %c0_i32 = arith.constant 0 : i32
    %c0_i32_0 = arith.constant 0 : i32
    %c0_i32_1 = arith.constant 0 : i32
    return %c0_i32, %c0_i32_0 : i32, i32
  }
  func.func @transform_4(%arg0: i32) -> (i32, i32) {
    %c0_i32 = arith.constant 0 : i32
    %c0_i32_0 = arith.constant 0 : i32
    %c0_i32_1 = arith.constant 0 : i32
    return %c0_i32, %c0_i32_0 : i32, i32
  }
  func.func @transform_5(%arg0: i32) -> (i32, i32) {
    %c0_i32 = arith.constant 0 : i32
    %c0_i32_0 = arith.constant 0 : i32
    %c0_i32_1 = arith.constant 0 : i32
    return %c0_i32, %c0_i32_0 : i32, i32
  }
  func.func @transform_6(%arg0: i32) -> (i32, i32) {
    %c0_i32 = arith.constant 0 : i32
    %c0_i32_0 = arith.constant 0 : i32
    return %arg0, %c0_i32 : i32, i32
  }
}

</mosaic_0001>

<llo_original>
// kernel: tpu_custom_call.1
$region0: #{tpu_custom_call.1}
  #allocation0 [shape = 'u32[]', space=smem, size = 0x4, offset = 0x4, fixed_abs, tag = 'smem constant byte address 0x4 - core index']
  #allocation1 [shape = 'u32[72,128]{1,0:T(1,128)}', space=vmem, size = 0x9000, scoped, tag = 'internal scratch']
  %s0 = inlined_call_operand.hbm [shape: f32[8,512], index: 0, kind: input, shape index: {}]
  %s1 = inlined_call_operand.vmem [shape: f32[512,16], index: 1, kind: input, shape index: {}]
  %s2 = inlined_call_operand.vmem [shape: f32[16,512], index: 2, kind: input, shape index: {}]
  %s3 = inlined_call_operand.vmem [shape: f32[512,128], index: 3, kind: input, shape index: {}]
  %s4 = inlined_call_operand.hbm [shape: f32[16,16], index: 4, kind: input, shape index: {}]
  %s5 = inlined_call_operand.vmem [shape: f32[1,16], index: 5, kind: input, shape index: {}]
  %s6 = inlined_call_operand.hbm [shape: f32[8,128], index: 6, kind: output, shape index: {}]
  %s7 = sld [smem:[#allocation0]]
  $region42: #{tpu_custom_call.1} parent=0
    _
  %s9 = ssub.s32 1, %s7
  %s10 = scalar_select 0, %s9, %s7
  $region1: #{tpu_custom_call.1} parent=0
    #allocation2 [shape = 'u8[16384]{0}', space=vmem, size = 0x4000, scoped, tag = 'input window, operand 0, single buffered']
    #allocation3 [shape = 's32[1]{0}', space=sflag, size = 0x4, scoped, tag = 'scoped memory for tpu_custom_call.1']
    #allocation4 [shape = 's32[1]{0}', space=sflag, size = 0x4, scoped, tag = 'scoped memory for tpu_custom_call.1']
    #allocation5 [shape = 'u8[8192]{0}', space=vmem, size = 0x2000, scoped, tag = 'input window, operand 4, single buffered']
    #allocation6 [shape = 's32[1]{0}', space=sflag, size = 0x4, scoped, tag = 'scoped memory for tpu_custom_call.1']
    #allocation7 [shape = 'u8[4096]{0}', space=vmem, size = 0x1000, scoped, tag = 'output window, operand 0, single buffered']
    %11 = vsyncpa [#allocation3], 0
    %12 = vsyncpa [#allocation6], 0
    %13 = vsyncpa [#allocation4], 0
    // Predicated region
    $region2: #{tpu_custom_call.1} parent=1 // pred_check
      _
    $region3: #{tpu_custom_call.1} parent=1 // pred_check_branch
      %15 = sbr.rel (0) target = $region5
    $region4: #{tpu_custom_call.1} parent=1 // pred_region
      %17 = vsyncadd [#allocation3], 0
      %s19 = sshll.u32 %s0, 4
      %s20 = int_to_ptr.hbm [resolvable:$true] %s19
      %s21 = sshll.u32 [#allocation2], 4
      %s22 = int_to_ptr.vmem [resolvable:$true] %s21
      %24 = dma.hbm_to_vmem [thread:$0]  %s20, 512, %s22, [#allocation3]
    $region5: #{tpu_custom_call.1} parent=1 // pred_fallthru
      _
    // Predicated region
    $region6: #{tpu_custom_call.1} parent=1 // pred_check
      _
    $region7: #{tpu_custom_call.1} parent=1 // pred_check_branch
      %26 = sbr.rel (0) target = $region9
    $region8: #{tpu_custom_call.1} parent=1 // pred_region
      _
    $region9: #{tpu_custom_call.1} parent=1 // pred_fallthru
      _
    // Predicated region
    $region10: #{tpu_custom_call.1} parent=1 // pred_check
      _
    $region11: #{tpu_custom_call.1} parent=1 // pred_check_branch
      %28 = sbr.rel (0) target = $region13
    $region12: #{tpu_custom_call.1} parent=1 // pred_region
      _
    $region13: #{tpu_custom_call.1} parent=1 // pred_fallthru
      _
    // Predicated region
    $region14: #{tpu_custom_call.1} parent=1 // pred_check
      _
    $region15: #{tpu_custom_call.1} parent=1 // pred_check_branch
      %30 = sbr.rel (0) target = $region17
    $region16: #{tpu_custom_call.1} parent=1 // pred_region
      _
    $region17: #{tpu_custom_call.1} parent=1 // pred_fallthru
      _
    // Predicated region
    $region18: #{tpu_custom_call.1} parent=1 // pred_check
      _
    $region19: #{tpu_custom_call.1} parent=1 // pred_check_branch
      %32 = sbr.rel (0) target = $region21
    $region20: #{tpu_custom_call.1} parent=1 // pred_region
      %34 = vsyncadd [#allocation6], 0
      %s35 = sshll.u32 %s4, 4
      %s36 = int_to_ptr.hbm [resolvable:$true] %s35
      %s37 = sshll.u32 [#allocation5], 4
      %s38 = int_to_ptr.vmem [resolvable:$true] %s37
      %43 = dma.hbm_to_vmem [thread:$0]  %s36, 256, %s38, [#allocation6], 128, 128, 8
    $region21: #{tpu_custom_call.1} parent=1 // pred_fallthru
      _
    // Predicated region
    $region22: #{tpu_custom_call.1} parent=1 // pred_check
      _
    $region23: #{tpu_custom_call.1} parent=1 // pred_check_branch
      %45 = sbr.rel (0) target = $region25
    $region24: #{tpu_custom_call.1} parent=1 // pred_region
      _
    $region25: #{tpu_custom_call.1} parent=1 // pred_fallthru
      _
    // Predicated region
    $region26: #{tpu_custom_call.1} parent=1 // pred_check
      _
    $region27: #{tpu_custom_call.1} parent=1 // pred_check_branch
      %47 = sbr.rel (0) target = $region29
    $region28: #{tpu_custom_call.1} parent=1 // pred_region
      %49 = dma.done [#allocation3], 512
    $region29: #{tpu_custom_call.1} parent=1 // pred_fallthru
      _
    // Predicated region
    $region30: #{tpu_custom_call.1} parent=1 // pred_check
      _
    $region31: #{tpu_custom_call.1} parent=1 // pred_check_branch
      %51 = sbr.rel (0) target = $region33
    $region32: #{tpu_custom_call.1} parent=1 // pred_region
      %53 = dma.done [#allocation6], 256
    $region33: #{tpu_custom_call.1} parent=1 // pred_fallthru
      _
    %v54 = vld [vmem:[#allocation2] sm:$0xff]
    %v55 = vld [vmem:[#allocation2 + $0x8] sm:$0xff]
    %v56 = vld [vmem:[#allocation2 + $0x10] sm:$0xff]
    %v57 = vld [vmem:[#allocation2 + $0x18] sm:$0xff]
    %v58 = vld [vmem:[%s1] sm:$0xff]
    %v59 = vld [vmem:[%s1 + $0x8] sm:$0xff]
    %v60 = vld [vmem:[%s1 + $0x10] sm:$0xff]
    %v61 = vld [vmem:[%s1 + $0x18] sm:$0xff]
    %v62 = vld [vmem:[%s1 + $0x20] sm:$0xff]
    %v63 = vld [vmem:[%s1 + $0x28] sm:$0xff]
    %v64 = vld [vmem:[%s1 + $0x30] sm:$0xff]
    %v65 = vld [vmem:[%s1 + $0x38] sm:$0xff]
    %v66 = vld [vmem:[%s1 + $0x40] sm:$0xff]
    %v67 = vld [vmem:[%s1 + $0x48] sm:$0xff]
    %v68 = vld [vmem:[%s1 + $0x50] sm:$0xff]
    %v69 = vld [vmem:[%s1 + $0x58] sm:$0xff]
    %v70 = vld [vmem:[%s1 + $0x60] sm:$0xff]
    %v71 = vld [vmem:[%s1 + $0x68] sm:$0xff]
    %v72 = vld [vmem:[%s1 + $0x70] sm:$0xff]
    %v73 = vld [vmem:[%s1 + $0x78] sm:$0xff]
    %v74 = vld [vmem:[%s1 + $0x80] sm:$0xff]
    %v75 = vld [vmem:[%s1 + $0x88] sm:$0xff]
    %v76 = vld [vmem:[%s1 + $0x90] sm:$0xff]
    %v77 = vld [vmem:[%s1 + $0x98] sm:$0xff]
    %v78 = vld [vmem:[%s1 + $0xa0] sm:$0xff]
    %v79 = vld [vmem:[%s1 + $0xa8] sm:$0xff]
    %v80 = vld [vmem:[%s1 + $0xb0] sm:$0xff]
    %v81 = vld [vmem:[%s1 + $0xb8] sm:$0xff]
    %v82 = vld [vmem:[%s1 + $0xc0] sm:$0xff]
    %v83 = vld [vmem:[%s1 + $0xc8] sm:$0xff]
    %v84 = vld [vmem:[%s1 + $0xd0] sm:$0xff]
    %v85 = vld [vmem:[%s1 + $0xd8] sm:$0xff]
    %v86 = vld [vmem:[%s1 + $0xe0] sm:$0xff]
    %v87 = vld [vmem:[%s1 + $0xe8] sm:$0xff]
    %v88 = vld [vmem:[%s1 + $0xf0] sm:$0xff]
    %v89 = vld [vmem:[%s1 + $0xf8] sm:$0xff]
    %v90 = vld [vmem:[%s1 + $0x100] sm:$0xff]
    %v91 = vld [vmem:[%s1 + $0x108] sm:$0xff]
    %v92 = vld [vmem:[%s1 + $0x110] sm:$0xff]
    %v93 = vld [vmem:[%s1 + $0x118] sm:$0xff]
    %v94 = vld [vmem:[%s1 + $0x120] sm:$0xff]
    %v95 = vld [vmem:[%s1 + $0x128] sm:$0xff]
    %v96 = vld [vmem:[%s1 + $0x130] sm:$0xff]
    %v97 = vld [vmem:[%s1 + $0x138] sm:$0xff]
    %v98 = vld [vmem:[%s1 + $0x140] sm:$0xff]
    %v99 = vld [vmem:[%s1 + $0x148] sm:$0xff]
    %v100 = vld [vmem:[%s1 + $0x150] sm:$0xff]
    %v101 = vld [vmem:[%s1 + $0x158] sm:$0xff]
    %v102 = vld [vmem:[%s1 + $0x160] sm:$0xff]
    %v103 = vld [vmem:[%s1 + $0x168] sm:$0xff]
    %v104 = vld [vmem:[%s1 + $0x170] sm:$0xff]
    %v105 = vld [vmem:[%s1 + $0x178] sm:$0xff]
    %v106 = vld [vmem:[%s1 + $0x180] sm:$0xff]
    %v107 = vld [vmem:[%s1 + $0x188] sm:$0xff]
    %v108 = vld [vmem:[%s1 + $0x190] sm:$0xff]
    %v109 = vld [vmem:[%s1 + $0x198] sm:$0xff]
    %v110 = vld [vmem:[%s1 + $0x1a0] sm:$0xff]
    %v111 = vld [vmem:[%s1 + $0x1a8] sm:$0xff]
    %v112 = vld [vmem:[%s1 + $0x1b0] sm:$0xff]
    %v113 = vld [vmem:[%s1 + $0x1b8] sm:$0xff]
    %v114 = vld [vmem:[%s1 + $0x1c0] sm:$0xff]
    %v115 = vld [vmem:[%s1 + $0x1c8] sm:$0xff]
    %v116 = vld [vmem:[%s1 + $0x1d0] sm:$0xff]
    %v117 = vld [vmem:[%s1 + $0x1d8] sm:$0xff]
    %v118 = vld [vmem:[%s1 + $0x1e0] sm:$0xff]
    %v119 = vld [vmem:[%s1 + $0x1e8] sm:$0xff]
    %v120 = vld [vmem:[%s1 + $0x1f0] sm:$0xff]
    %v121 = vld [vmem:[%s1 + $0x1f8] sm:$0xff]
    %122 = vmatpush.msra.mxu0 %v73
    %123 = vmatpush.msra.mxu0 %v72
    %124 = vmatpush.msra.mxu0 %v71
    %125 = vmatpush.msra.mxu0 %v70
    %126 = vmatpush.msra.mxu0 %v69
    %127 = vmatpush.msra.mxu0 %v68
    %128 = vmatpush.msra.mxu0 %v67
    %129 = vmatpush.msra.mxu0 %v66
    %130 = vmatpush.msra.mxu0 %v65
    %131 = vmatpush.msra.mxu0 %v64
    %132 = vmatpush.msra.mxu0 %v63
    %133 = vmatpush.msra.mxu0 %v62
    %134 = vmatpush.msra.mxu0 %v61
    %135 = vmatpush.msra.mxu0 %v60
    %136 = vmatpush.msra.mxu0 %v59
    %137 = vmatpush.msra.mxu0 %v58
    %138 = vmatmul.f32.gmra.mxu0 %v54
    %v139 = vpop.f32.mrf.mxu0
    %v140 = vadd.f32 0.0, %v139
    %141 = vdwg.mxu0
    %142 = vmatpush.msra.mxu0 %v89
    %143 = vmatpush.msra.mxu0 %v88
    %144 = vmatpush.msra.mxu0 %v87
    %145 = vmatpush.msra.mxu0 %v86
    %146 = vmatpush.msra.mxu0 %v85
    %147 = vmatpush.msra.mxu0 %v84
    %148 = vmatpush.msra.mxu0 %v83
    %149 = vmatpush.msra.mxu0 %v82
    %150 = vmatpush.msra.mxu0 %v81
    %151 = vmatpush.msra.mxu0 %v80
    %152 = vmatpush.msra.mxu0 %v79
    %153 = vmatpush.msra.mxu0 %v78
    %154 = vmatpush.msra.mxu0 %v77
    %155 = vmatpush.msra.mxu0 %v76
    %156 = vmatpush.msra.mxu0 %v75
    %157 = vmatpush.msra.mxu0 %v74
    %158 = vmatmul.f32.gmra.mxu0 %v55
    %v159 = vpop.f32.mrf.mxu0
    %v160 = vadd.f32 %v140, %v159
    %161 = vdwg.mxu0
    %162 = vmatpush.msra.mxu0 %v105
    %163 = vmatpush.msra.mxu0 %v104
    %164 = vmatpush.msra.mxu0 %v103
    %165 = vmatpush.msra.mxu0 %v102
    %166 = vmatpush.msra.mxu0 %v101
    %167 = vmatpush.msra.mxu0 %v100
    %168 = vmatpush.msra.mxu0 %v99
    %169 = vmatpush.msra.mxu0 %v98
    %170 = vmatpush.msra.mxu0 %v97
    %171 = vmatpush.msra.mxu0 %v96
    %172 = vmatpush.msra.mxu0 %v95
    %173 = vmatpush.msra.mxu0 %v94
    %174 = vmatpush.msra.mxu0 %v93
    %175 = vmatpush.msra.mxu0 %v92
    %176 = vmatpush.msra.mxu0 %v91
    %177 = vmatpush.msra.mxu0 %v90
    %178 = vmatmul.f32.gmra.mxu0 %v56
    %v179 = vpop.f32.mrf.mxu0
    %v180 = vadd.f32 %v160, %v179
    %181 = vdwg.mxu0
    %182 = vmatpush.msra.mxu0 %v121
    %183 = vmatpush.msra.mxu0 %v120
    %184 = vmatpush.msra.mxu0 %v119
    %185 = vmatpush.msra.mxu0 %v118
    %186 = vmatpush.msra.mxu0 %v117
    %187 = vmatpush.msra.mxu0 %v116
    %188 = vmatpush.msra.mxu0 %v115
    %189 = vmatpush.msra.mxu0 %v114
    %190 = vmatpush.msra.mxu0 %v113
    %191 = vmatpush.msra.mxu0 %v112
    %192 = vmatpush.msra.mxu0 %v111
    %193 = vmatpush.msra.mxu0 %v110
    %194 = vmatpush.msra.mxu0 %v109
    %195 = vmatpush.msra.mxu0 %v108
    %196 = vmatpush.msra.mxu0 %v107
    %197 = vmatpush.msra.mxu0 %v106
    %198 = vmatmul.f32.gmra.mxu0 %v57
    %v199 = vpop.f32.mrf.mxu0
    %v200 = vadd.f32 %v180, %v199
    %201 = vdwg.mxu0
    %v202 = vld [vmem:[#allocation5] sm:$0xff]
    %v203 = vld [vmem:[#allocation5 + $0x8] sm:$0xff]
    %v204 = vld [vmem:[%s5] sm:$0x1]
    %v206 = vperm.slane %v204, 0
    %vm208 = vcmask 130048
    %v210 = vsel %vm208, %v200, 0
    %212 = vmatpush.msra.mxu0 0.0
    %213 = vmatpush.msra.mxu0 0.0
    %214 = vmatpush.msra.mxu0 0.0
    %215 = vmatpush.msra.mxu0 0.0
    %216 = vmatpush.msra.mxu0 0.0
    %217 = vmatpush.msra.mxu0 0.0
    %218 = vmatpush.msra.mxu0 0.0
    %219 = vmatpush.msra.mxu0 0.0
    %220 = vmatpush.msra.mxu0 0.0
    %221 = vmatpush.msra.mxu0 0.0
    %222 = vmatpush.msra.mxu0 0.0
    %223 = vmatpush.msra.mxu0 0.0
    %224 = vmatpush.msra.mxu0 0.0
    %225 = vmatpush.msra.mxu0 0.0
    %226 = vmatpush.msra.mxu0 %v203
    %227 = vmatpush.msra.mxu0 %v202
    %228 = vmatmul.f32.gmra.mxu0 %v210
    %v229 = vpop.f32.mrf.mxu0
    %v230 = vadd.f32 %v206, %v229
    %231 = vdwg.mxu0
    %v232 = vxor.u32 %v230, 2147483648
    %v233 = vmul.f32 %v232, 1.442695
    %v234 = vpow.pop %v233
    %v235 = vadd.f32 %v234, 1.0
    %v236 = vrcp.pop %v235
    %v237 = vmul.f32 %v235, %v236
    %v238 = vsub.f32 1.0, %v237
    %v239 = vmul.f32 %v236, %v238
    %v240 = vadd.f32 %v236, %v239
    %vm241 = vweird.f32 %v235
    %vm242 = vweird.f32 %v236
    %vm243 = vmor %vm241, %vm242
    %v244 = vsel %vm243, %v236, %v240
    %v245 = vand.u32 2147483647, %v235
    %vm246 = vcmp.eq.f32.partialorder %v245, 8.507059e+37
    %v247 = vand.u32 %v235, 2147483648
    %v248 = vor.u32 1.1754944e-38, %v247
    %v249 = vsel %vm246, %v248, %v244
    %v250 = vmul.f32 1.0, %v249
    %v251 = vld [vmem:[%s2] sm:$0xff]
    %v252 = vld [vmem:[%s2 + $0x8] sm:$0xff]
    %v253 = vld [vmem:[%s2 + $0x10] sm:$0xff]
    %v254 = vld [vmem:[%s2 + $0x18] sm:$0xff]
    %v255 = vld [vmem:[%s2 + $0x20] sm:$0xff]
    %v256 = vld [vmem:[%s2 + $0x28] sm:$0xff]
    %v257 = vld [vmem:[%s2 + $0x30] sm:$0xff]
    %v258 = vld [vmem:[%s2 + $0x38] sm:$0xff]
    %v260 = vsel %vm208, %v250, 0
    %262 = vmatpush.msra.mxu0 0.0
    %263 = vmatpush.msra.mxu0 0.0
    %264 = vmatpush.msra.mxu0 0.0
    %265 = vmatpush.msra.mxu0 0.0
    %266 = vmatpush.msra.mxu0 0.0
    %267 = vmatpush.msra.mxu0 0.0
    %268 = vmatpush.msra.mxu0 0.0
    %269 = vmatpush.msra.mxu0 0.0
    %270 = vmatpush.msra.mxu0 0.0
    %271 = vmatpush.msra.mxu0 0.0
    %272 = vmatpush.msra.mxu0 0.0
    %273 = vmatpush.msra.mxu0 0.0
    %274 = vmatpush.msra.mxu0 0.0
    %275 = vmatpush.msra.mxu0 0.0
    %276 = vmatpush.msra.mxu0 %v255
    %277 = vmatpush.msra.mxu0 %v251
    %278 = vmatmul.f32.gmra.mxu0 %v260
    %v279 = vpop.f32.mrf.mxu0
    %v280 = vadd.f32 0.0, %v279
    %281 = vdwg.mxu0
    %282 = vmatpush.msra.mxu0 0.0
    %283 = vmatpush.msra.mxu0 0.0
    %284 = vmatpush.msra.mxu0 0.0
    %285 = vmatpush.msra.mxu0 0.0
    %286 = vmatpush.msra.mxu0 0.0
    %287 = vmatpush.msra.mxu0 0.0
    %288 = vmatpush.msra.mxu0 0.0
    %289 = vmatpush.msra.mxu0 0.0
    %290 = vmatpush.msra.mxu0 0.0
    %291 = vmatpush.msra.mxu0 0.0
    %292 = vmatpush.msra.mxu0 0.0
    %293 = vmatpush.msra.mxu0 0.0
    %294 = vmatpush.msra.mxu0 0.0
    %295 = vmatpush.msra.mxu0 0.0
    %296 = vmatpush.msra.mxu0 %v256
    %297 = vmatpush.msra.mxu0 %v252
    %298 = vmatmul.f32.gmra.mxu0 %v260
    %v299 = vpop.f32.mrf.mxu0
    %v300 = vadd.f32 0.0, %v299
    %301 = vdwg.mxu0
    %302 = vmatpush.msra.mxu0 0.0
    %303 = vmatpush.msra.mxu0 0.0
    %304 = vmatpush.msra.mxu0 0.0
    %305 = vmatpush.msra.mxu0 0.0
    %306 = vmatpush.msra.mxu0 0.0
    %307 = vmatpush.msra.mxu0 0.0
    %308 = vmatpush.msra.mxu0 0.0
    %309 = vmatpush.msra.mxu0 0.0
    %310 = vmatpush.msra.mxu0 0.0
    %311 = vmatpush.msra.mxu0 0.0
    %312 = vmatpush.msra.mxu0 0.0
    %313 = vmatpush.msra.mxu0 0.0
    %314 = vmatpush.msra.mxu0 0.0
    %315 = vmatpush.msra.mxu0 0.0
    %316 = vmatpush.msra.mxu0 %v257
    %317 = vmatpush.msra.mxu0 %v253
    %318 = vmatmul.f32.gmra.mxu0 %v260
    %v319 = vpop.f32.mrf.mxu0
    %v320 = vadd.f32 0.0, %v319
    %321 = vdwg.mxu0
    %322 = vmatpush.msra.mxu0 0.0
    %323 = vmatpush.msra.mxu0 0.0
    %324 = vmatpush.msra.mxu0 0.0
    %325 = vmatpush.msra.mxu0 0.0
    %326 = vmatpush.msra.mxu0 0.0
    %327 = vmatpush.msra.mxu0 0.0
    %328 = vmatpush.msra.mxu0 0.0
    %329 = vmatpush.msra.mxu0 0.0
    %330 = vmatpush.msra.mxu0 0.0
    %331 = vmatpush.msra.mxu0 0.0
    %332 = vmatpush.msra.mxu0 0.0
    %333 = vmatpush.msra.mxu0 0.0
    %334 = vmatpush.msra.mxu0 0.0
    %335 = vmatpush.msra.mxu0 0.0
    %336 = vmatpush.msra.mxu0 %v258
    %337 = vmatpush.msra.mxu0 %v254
    %338 = vmatmul.f32.gmra.mxu0 %v260
    %v339 = vpop.f32.mrf.mxu0
    %v340 = vadd.f32 0.0, %v339
    %341 = vdwg.mxu0
    %v342 = vmul.f32 %v54, %v280
    %v343 = vmul.f32 %v55, %v300
    %v344 = vmul.f32 %v56, %v320
    %v345 = vmul.f32 %v57, %v340
    %v346 = vld [vmem:[%s3] sm:$0xff]
    %v347 = vld [vmem:[%s3 + $0x8] sm:$0xff]
    %v348 = vld [vmem:[%s3 + $0x10] sm:$0xff]
    %v349 = vld [vmem:[%s3 + $0x18] sm:$0xff]
    %v350 = vld [vmem:[%s3 + $0x20] sm:$0xff]
    %v351 = vld [vmem:[%s3 + $0x28] sm:$0xff]
    %v352 = vld [vmem:[%s3 + $0x30] sm:$0xff]
    %v353 = vld [vmem:[%s3 + $0x38] sm:$0xff]
    %v354 = vld [vmem:[%s3 + $0x40] sm:$0xff]
    %v355 = vld [vmem:[%s3 + $0x48] sm:$0xff]
    %v356 = vld [vmem:[%s3 + $0x50] sm:$0xff]
    %v357 = vld [vmem:[%s3 + $0x58] sm:$0xff]
    %v358 = vld [vmem:[%s3 + $0x60] sm:$0xff]
    %v359 = vld [vmem:[%s3 + $0x68] sm:$0xff]
    %v360 = vld [vmem:[%s3 + $0x70] sm:$0xff]
    %v361 = vld [vmem:[%s3 + $0x78] sm:$0xff]
    %v362 = vld [vmem:[%s3 + $0x80] sm:$0xff]
    %v363 = vld [vmem:[%s3 + $0x88] sm:$0xff]
    %v364 = vld [vmem:[%s3 + $0x90] sm:$0xff]
    %v365 = vld [vmem:[%s3 + $0x98] sm:$0xff]
    %v366 = vld [vmem:[%s3 + $0xa0] sm:$0xff]
    %v367 = vld [vmem:[%s3 + $0xa8] sm:$0xff]
    %v368 = vld [vmem:[%s3 + $0xb0] sm:$0xff]
    %v369 = vld [vmem:[%s3 + $0xb8] sm:$0xff]
    %v370 = vld [vmem:[%s3 + $0xc0] sm:$0xff]
    %v371 = vld [vmem:[%s3 + $0xc8] sm:$0xff]
    %v372 = vld [vmem:[%s3 + $0xd0] sm:$0xff]
    %v373 = vld [vmem:[%s3 + $0xd8] sm:$0xff]
    %v374 = vld [vmem:[%s3 + $0xe0] sm:$0xff]
    %v375 = vld [vmem:[%s3 + $0xe8] sm:$0xff]
    %v376 = vld [vmem:[%s3 + $0xf0] sm:$0xff]
    %v377 = vld [vmem:[%s3 + $0xf8] sm:$0xff]
    %v378 = vld [vmem:[%s3 + $0x100] sm:$0xff]
    %v379 = vld [vmem:[%s3 + $0x108] sm:$0xff]
    %v380 = vld [vmem:[%s3 + $0x110] sm:$0xff]
    %v381 = vld [vmem:[%s3 + $0x118] sm:$0xff]
    %v382 = vld [vmem:[%s3 + $0x120] sm:$0xff]
    %v383 = vld [vmem:[%s3 + $0x128] sm:$0xff]
    %v384 = vld [vmem:[%s3 + $0x130] sm:$0xff]
    %v385 = vld [vmem:[%s3 + $0x138] sm:$0xff]
    %v386 = vld [vmem:[%s3 + $0x140] sm:$0xff]
    %v387 = vld [vmem:[%s3 + $0x148] sm:$0xff]
    %v388 = vld [vmem:[%s3 + $0x150] sm:$0xff]
    %v389 = vld [vmem:[%s3 + $0x158] sm:$0xff]
    %v390 = vld [vmem:[%s3 + $0x160] sm:$0xff]
    %v391 = vld [vmem:[%s3 + $0x168] sm:$0xff]
    %v392 = vld [vmem:[%s3 + $0x170] sm:$0xff]
    %v393 = vld [vmem:[%s3 + $0x178] sm:$0xff]
    %v394 = vld [vmem:[%s3 + $0x180] sm:$0xff]
    %v395 = vld [vmem:[%s3 + $0x188] sm:$0xff]
    %v396 = vld [vmem:[%s3 + $0x190] sm:$0xff]
    %v397 = vld [vmem:[%s3 + $0x198] sm:$0xff]
    %v398 = vld [vmem:[%s3 + $0x1a0] sm:$0xff]
    %v399 = vld [vmem:[%s3 + $0x1a8] sm:$0xff]
    %v400 = vld [vmem:[%s3 + $0x1b0] sm:$0xff]
    %v401 = vld [vmem:[%s3 + $0x1b8] sm:$0xff]
    %v402 = vld [vmem:[%s3 + $0x1c0] sm:$0xff]
    %v403 = vld [vmem:[%s3 + $0x1c8] sm:$0xff]
    %v404 = vld [vmem:[%s3 + $0x1d0] sm:$0xff]
    %v405 = vld [vmem:[%s3 + $0x1d8] sm:$0xff]
    %v406 = vld [vmem:[%s3 + $0x1e0] sm:$0xff]
    %v407 = vld [vmem:[%s3 + $0x1e8] sm:$0xff]
    %v408 = vld [vmem:[%s3 + $0x1f0] sm:$0xff]
    %v409 = vld [vmem:[%s3 + $0x1f8] sm:$0xff]
    %410 = vmatpush.msra.mxu0 %v361
    %411 = vmatpush.msra.mxu0 %v360
    %412 = vmatpush.msra.mxu0 %v359
    %413 = vmatpush.msra.mxu0 %v358
    %414 = vmatpush.msra.mxu0 %v357
    %415 = vmatpush.msra.mxu0 %v356
    %416 = vmatpush.msra.mxu0 %v355
    %417 = vmatpush.msra.mxu0 %v354
    %418 = vmatpush.msra.mxu0 %v353
    %419 = vmatpush.msra.mxu0 %v352
    %420 = vmatpush.msra.mxu0 %v351
    %421 = vmatpush.msra.mxu0 %v350
    %422 = vmatpush.msra.mxu0 %v349
    %423 = vmatpush.msra.mxu0 %v348
    %424 = vmatpush.msra.mxu0 %v347
    %425 = vmatpush.msra.mxu0 %v346
    %426 = vmatmul.f32.gmra.mxu0 %v342
    %v427 = vpop.f32.mrf.mxu0
    %v428 = vadd.f32 0.0, %v427
    %429 = vdwg.mxu0
    %430 = vmatpush.msra.mxu0 %v377
    %431 = vmatpush.msra.mxu0 %v376
    %432 = vmatpush.msra.mxu0 %v375
    %433 = vmatpush.msra.mxu0 %v374
    %434 = vmatpush.msra.mxu0 %v373
    %435 = vmatpush.msra.mxu0 %v372
    %436 = vmatpush.msra.mxu0 %v371
    %437 = vmatpush.msra.mxu0 %v370
    %438 = vmatpush.msra.mxu0 %v369
    %439 = vmatpush.msra.mxu0 %v368
    %440 = vmatpush.msra.mxu0 %v367
    %441 = vmatpush.msra.mxu0 %v366
    %442 = vmatpush.msra.mxu0 %v365
    %443 = vmatpush.msra.mxu0 %v364
    %444 = vmatpush.msra.mxu0 %v363
    %445 = vmatpush.msra.mxu0 %v362
    %446 = vmatmul.f32.gmra.mxu0 %v343
    %v447 = vpop.f32.mrf.mxu0
    %v448 = vadd.f32 %v428, %v447
    %449 = vdwg.mxu0
    %450 = vmatpush.msra.mxu0 %v393
    %451 = vmatpush.msra.mxu0 %v392
    %452 = vmatpush.msra.mxu0 %v391
    %453 = vmatpush.msra.mxu0 %v390
    %454 = vmatpush.msra.mxu0 %v389
    %455 = vmatpush.msra.mxu0 %v388
    %456 = vmatpush.msra.mxu0 %v387
    %457 = vmatpush.msra.mxu0 %v386
    %458 = vmatpush.msra.mxu0 %v385
    %459 = vmatpush.msra.mxu0 %v384
    %460 = vmatpush.msra.mxu0 %v383
    %461 = vmatpush.msra.mxu0 %v382
    %462 = vmatpush.msra.mxu0 %v381
    %463 = vmatpush.msra.mxu0 %v380
    %464 = vmatpush.msra.mxu0 %v379
    %465 = vmatpush.msra.mxu0 %v378
    %466 = vmatmul.f32.gmra.mxu0 %v344
    %v467 = vpop.f32.mrf.mxu0
    %v468 = vadd.f32 %v448, %v467
    %469 = vdwg.mxu0
    %470 = vmatpush.msra.mxu0 %v409
    %471 = vmatpush.msra.mxu0 %v408
    %472 = vmatpush.msra.mxu0 %v407
    %473 = vmatpush.msra.mxu0 %v406
    %474 = vmatpush.msra.mxu0 %v405
    %475 = vmatpush.msra.mxu0 %v404
    %476 = vmatpush.msra.mxu0 %v403
    %477 = vmatpush.msra.mxu0 %v402
    %478 = vmatpush.msra.mxu0 %v401
    %479 = vmatpush.msra.mxu0 %v400
    %480 = vmatpush.msra.mxu0 %v399
    %481 = vmatpush.msra.mxu0 %v398
    %482 = vmatpush.msra.mxu0 %v397
    %483 = vmatpush.msra.mxu0 %v396
    %484 = vmatpush.msra.mxu0 %v395
    %485 = vmatpush.msra.mxu0 %v394
    %486 = vmatmul.f32.gmra.mxu0 %v345
    %v487 = vpop.f32.mrf.mxu0
    %v488 = vadd.f32 %v468, %v487
    %489 = vdwg.mxu0
    %490 = vst [vmem:[#allocation7] sm:$0xff] %v488
    // Predicated region
    $region34: #{tpu_custom_call.1} parent=1 // pred_check
      _
    $region35: #{tpu_custom_call.1} parent=1 // pred_check_branch
      %492 = sbr.rel (0) target = $region37
    $region36: #{tpu_custom_call.1} parent=1 // pred_region
      %494 = vsyncadd [#allocation4], 0
      %s496 = sshll.u32 [#allocation7], 4
      %s497 = int_to_ptr.vmem [resolvable:$true] %s496
      %s498 = sshll.u32 %s6, 4
      %s499 = int_to_ptr.hbm [resolvable:$true] %s498
      %501 = dma.vmem_to_hbm [thread:$0]  %s497, 128, %s499, [#allocation4]
    $region37: #{tpu_custom_call.1} parent=1 // pred_fallthru
      _
    // Predicated region
    $region38: #{tpu_custom_call.1} parent=1 // pred_check
      _
    $region39: #{tpu_custom_call.1} parent=1 // pred_check_branch
      %503 = sbr.rel (0) target = $region41
    $region40: #{tpu_custom_call.1} parent=1 // pred_region
      %505 = dma.done [#allocation4], 128
    $region41: #{tpu_custom_call.1} parent=1 // pred_fallthru
      _
    %506 = vsyncpa [#allocation3], 1
    %507 = vsyncpa [#allocation6], 1
    %508 = vsyncpa [#allocation4], 1

</llo_original>
